<compile_context>
chip_gen: v5e
topology: v5e:2x2
jax: 0.10.0
libtpu: 0.0.40
codegen_flags: <defaults>
</compile_context>

<pallas_src>
import jax
import jax.numpy as jnp
from jax.experimental import pallas as pl
from jax.experimental.pallas import tpu as pltpu


def _bisenet_output_kernel(x_ref, w1_ref, bias_ref, w2_ref, o_ref):
    # x_ref:    (1, 9*Cin, N_out)   im2col'd input (lane-dense, N_out % 128 == 0)
    # w1_ref:   (Cmid, 9*Cin)       3x3 conv weights, BN scale folded, stacked K
    # bias_ref: (Cmid, 1)           folded BN bias (f32)
    # w2_ref:   (n_classes, Cmid)   1x1 conv weights
    # o_ref:    (1, n_classes, N_out)
    x = x_ref[0]                                            # (9*Cin, N_out)

    # 3x3 conv as a single stacked-K MXU matmul, f32 accumulation.
    acc = jax.lax.dot_general(
        w1_ref[...], x,
        dimension_numbers=(((1,), (0,)), ((), ())),
        preferred_element_type=jnp.float32)                 # (Cmid, N_out) f32

    # Folded-BN bias + ReLU on the f32 accumulator (VPU, v5e-safe).
    y = jnp.maximum(acc + bias_ref[...], 0.0)               # (Cmid, N_out) f32

    # 1x1 conv: cast y to the weight streaming dtype (bf16 path stays bf16 on
    # the MXU; f32 path stays f32), accumulate in f32.
    out = jax.lax.dot_general(
        w2_ref[...], y.astype(w2_ref.dtype),
        dimension_numbers=(((1,), (0,)), ((), ())),
        preferred_element_type=jnp.float32)                 # (ncls, N_out) f32
    o_ref[0] = out.astype(o_ref.dtype)


def bisenet_output_forward(x_nchw, w1, bn_gamma, bn_beta, bn_mean, bn_var,
                           w2, eps=1e-5):
    """x_nchw: (B, Cin, H, W). w1: (Cmid, Cin, 3, 3) OIHW. w2: (ncls, Cmid, 1, 1).
    Returns (B, n_classes, H, W) in x_nchw.dtype (inference-mode BN)."""
    B, Cin, H, W = x_nchw.shape
    Cmid = w1.shape[0]
    n_classes = w2.shape[0]
    assert w1.shape == (Cmid, Cin, 3, 3) and w2.shape == (n_classes, Cmid, 1, 1)
    dt = x_nchw.dtype

    # Flattened-spatial layout: row stride Wp = W + 2 (stride-1, pad-1 conv).
    # out[b, c, h, w] lives at flat index n = h*Wp + w; the final [:, :, :, :W]
    # slice discards the wrap-around columns w in [W, W+2).
    Wp = W + 2
    N_out = ((H * Wp + 127) // 128) * 128    # whole rows, unmasked lane stores
    max_off = 2 * Wp + 2                     # largest tap offset (ky = kx = 2)
    Ntot = max_off + N_out                   # flat length every tap window needs
    rows_total = -(-Ntot // Wp)              # ceil
    pad_bottom = rows_total - (H + 1)        # 1 top pad row + real rows + slack

    # ---- wrapper-side glue (single pad, dtype preserved) ----
    x_pad = jnp.pad(x_nchw, ((0, 0), (0, 0), (1, pad_bottom), (1, 1)))
    x_flat = x_pad.reshape(B, Cin, rows_total * Wp)

    # im2col: 9 shifted copies stacked along the contraction dim -> (B, 9*Cin, N_out).
    # Cheap at small Cin (9x HBM for x is trivial); see TODO for the large-Cin path.
    offsets = [ky * Wp + kx for ky in range(3) for kx in range(3)]
    x_taps = jnp.concatenate(
        [x_flat[:, :, off:off + N_out] for off in offsets], axis=1)

    # Fold BN (inference) into the 3x3 weights + per-channel bias (fold in f32).
    scale = (bn_gamma / jnp.sqrt(bn_var + eps)).astype(jnp.float32)   # (Cmid,)
    bias = (bn_beta - bn_mean * scale).astype(jnp.float32)            # (Cmid,)
    w1_fold = w1.astype(jnp.float32) * scale[:, None, None, None]     # (Cmid,Cin,3,3)
    # K ordering must match x_taps: k = (ky*3 + kx)*Cin + c.
    w1_mat = jnp.transpose(w1_fold, (0, 2, 3, 1)).reshape(Cmid, 9 * Cin).astype(dt)
    w2_mat = w2[:, :, 0, 0].astype(dt)                                # (ncls, Cmid)
    bias_col = bias.reshape(Cmid, 1)                                  # (Cmid, 1) f32

    out_flat = pl.pallas_call(
        _bisenet_output_kernel,
        out_shape=jax.ShapeDtypeStruct((B, n_classes, N_out), dt),
        grid_spec=pltpu.PrefetchScalarGridSpec(
            num_scalar_prefetch=0,
            grid=(B,),
            in_specs=[
                pl.BlockSpec((1, 9 * Cin, N_out), lambda b: (b, 0, 0)),
                pl.BlockSpec((Cmid, 9 * Cin), lambda b: (0, 0)),
                pl.BlockSpec((Cmid, 1), lambda b: (0, 0)),
                pl.BlockSpec((n_classes, Cmid), lambda b: (0, 0)),
            ],
            out_specs=pl.BlockSpec((1, n_classes, N_out),
                                   lambda b: (b, 0, 0)),
        ),
        compiler_params=pltpu.CompilerParams(
            dimension_semantics=("parallel",)),
    )(x_taps, w1_mat, bias_col, w2_mat)

    # Slice + reshape back to NCHW (no extra pad copies).
    out = out_flat[:, :, :H * Wp].reshape(B, n_classes, H, Wp)[:, :, :, :W]
    return out


def _reference_forward(x_nchw, w1, bn_gamma, bn_beta, bn_mean, bn_var, w2,
                       eps=1e-5):
    # Pure-JAX f32 reference (NCHW convs) for correctness checking.
    y = jax.lax.conv_general_dilated(
        x_nchw.astype(jnp.float32), w1.astype(jnp.float32),
        window_strides=(1, 1), padding=((1, 1), (1, 1)),
        dimension_numbers=("NCHW", "OIHW", "NCHW"))
    scale = bn_gamma / jnp.sqrt(bn_var + eps)
    bias = bn_beta - bn_mean * scale
    y = y * scale[None, :, None, None] + bias[None, :, None, None]
    y = jnp.maximum(y, 0.0)
    out = jax.lax.conv_general_dilated(
        y, w2.astype(jnp.float32), window_strides=(1, 1),
        padding=((0, 0), (0, 0)),
        dimension_numbers=("NCHW", "OIHW", "NCHW"))
    return out


if __name__ == "__main__":
    # Small shapes: B=2, Cin=4, Cmid=8, n_classes=4, H=W=16.
    B, Cin, Cmid, n_classes, H, W = 2, 4, 8, 4, 16, 16

    key = jax.random.PRNGKey(0)
    kx, k1, k2, kbm, kbv = jax.random.split(key, 5)

    x = jax.random.normal(kx, (B, Cin, H, W), dtype=jnp.float32)

    # Deterministic "kaiming_normal_(a=1)" style init: std = sqrt(1 / fan_in).
    fan_in1 = Cin * 3 * 3
    w1 = jax.random.normal(k1, (Cmid, Cin, 3, 3), dtype=jnp.float32) * (
        (1.0 / fan_in1) ** 0.5)
    fan_in2 = Cmid * 1 * 1
    w2 = jax.random.normal(k2, (n_classes, Cmid, 1, 1), dtype=jnp.float32) * (
        (1.0 / fan_in2) ** 0.5)

    # Non-trivial inference-mode BatchNorm stats to exercise the BN fold.
    bn_gamma = 1.0 + 0.1 * jnp.arange(Cmid, dtype=jnp.float32)
    bn_beta = 0.05 * jnp.arange(Cmid, dtype=jnp.float32) - 0.2
    bn_mean = 0.1 * jax.random.normal(kbm, (Cmid,), dtype=jnp.float32)
    bn_var = 1.0 + 0.5 * jax.random.uniform(kbv, (Cmid,), dtype=jnp.float32)

    ref = jax.block_until_ready(
        _reference_forward(x, w1, bn_gamma, bn_beta, bn_mean, bn_var, w2))

    # f32 streaming path (tight tolerance).
    out = jax.block_until_ready(
        bisenet_output_forward(x, w1, bn_gamma, bn_beta, bn_mean, bn_var, w2))
    assert out.shape == (B, n_classes, H, W), out.shape
    assert jnp.allclose(out, ref, atol=1e-4, rtol=1e-4), (
        float(jnp.max(jnp.abs(out - ref))))

    # bf16 streaming path (bf16 operands into the MXU, f32 accumulation,
    # bf16 output writeback) -- looser tolerance vs. the f32 reference.
    out_bf16 = jax.block_until_ready(
        bisenet_output_forward(x.astype(jnp.bfloat16), w1, bn_gamma, bn_beta,
                               bn_mean, bn_var, w2))
    assert out_bf16.dtype == jnp.bfloat16
    max_err = float(jnp.max(jnp.abs(out_bf16.astype(jnp.float32) - ref)))
    assert max_err < 1e-1, max_err

    print("KERNEL_OK")
</pallas_src>

<mosaic_0001>
module attributes {stable_mosaic.version = 11 : i64} {
  func.func @_bisenet_output_kernel(%arg0: i32, %arg1: memref<1x36x384xf32, #tpu.memory_space<vmem>>, %arg2: memref<8x36xf32, #tpu.memory_space<vmem>>, %arg3: memref<8x1xf32, #tpu.memory_space<vmem>>, %arg4: memref<4x8xf32, #tpu.memory_space<vmem>>, %arg5: memref<1x4x384xf32, #tpu.memory_space<vmem>>) attributes {dimension_semantics = [#tpu.dimension_semantics<parallel>], iteration_bounds = array<i64: 2>, scalar_prefetch = 0 : i64, scratch_operands = 0 : i64, tpu.core_type = #tpu.core_type<tc>, window_params = [{transform_indices = @transform_0, window_bounds = array<i64: 1, 36, 384>}, {pipeline_mode = #tpu.pipeline_mode<synchronous>, transform_indices = @transform_1, window_bounds = array<i64: 8, 36>}, {pipeline_mode = #tpu.pipeline_mode<synchronous>, transform_indices = @transform_2, window_bounds = array<i64: 8, 1>}, {pipeline_mode = #tpu.pipeline_mode<synchronous>, transform_indices = @transform_3, window_bounds = array<i64: 4, 8>}, {transform_indices = @transform_4, window_bounds = array<i64: 1, 4, 384>}]} {
    %c0 = arith.constant 0 : index
    %c0_0 = arith.constant 0 : index
    %c0_1 = arith.constant 0 : index
    %0 = vector.load %arg1[%c0, %c0_0, %c0_1] : memref<1x36x384xf32, #tpu.memory_space<vmem>>, vector<1x36x384xf32>
    %1 = vector.shape_cast %0 : vector<1x36x384xf32> to vector<36x384xf32>
    %c0_2 = arith.constant 0 : index
    %c0_3 = arith.constant 0 : index
    %2 = vector.load %arg2[%c0_2, %c0_3] : memref<8x36xf32, #tpu.memory_space<vmem>>, vector<8x36xf32>
    %cst = arith.constant dense<0.000000e+00> : vector<8x384xf32>
    %3 = tpu.matmul %2, %1, %cst {dimension_numbers = #tpu.dot_dimension_numbers<[1], [0], [0], [1], [0, 0, 1, 1], [], []>} : vector<8x36xf32>, vector<36x384xf32>, vector<8x384xf32> -> vector<8x384xf32>
    %c0_4 = arith.constant 0 : index
    %c0_5 = arith.constant 0 : index
    %4 = vector.load %arg3[%c0_4, %c0_5] : memref<8x1xf32, #tpu.memory_space<vmem>>, vector<8x1xf32>
    %5 = vector.broadcast %4 : vector<8x1xf32> to vector<8x384xf32>
    %6 = arith.addf %3, %5 : vector<8x384xf32>
    %cst_6 = arith.constant 0.000000e+00 : f32
    %7 = vector.broadcast %cst_6 : f32 to vector<8x384xf32>
    %8 = arith.maximumf %6, %7 : vector<8x384xf32>
    %c0_7 = arith.constant 0 : index
    %c0_8 = arith.constant 0 : index
    %9 = vector.load %arg4[%c0_7, %c0_8] : memref<4x8xf32, #tpu.memory_space<vmem>>, vector<4x8xf32>
    %cst_9 = arith.constant dense<0.000000e+00> : vector<4x384xf32>
    %10 = tpu.matmul %9, %8, %cst_9 {dimension_numbers = #tpu.dot_dimension_numbers<[1], [0], [0], [1], [0, 0, 1, 1], [], []>} : vector<4x8xf32>, vector<8x384xf32>, vector<4x384xf32> -> vector<4x384xf32>
    %c0_10 = arith.constant 0 : index
    %c0_11 = arith.constant 0 : index
    %c0_12 = arith.constant 0 : index
    %11 = vector.load %arg5[%c0_10, %c0_11, %c0_12] : memref<1x4x384xf32, #tpu.memory_space<vmem>>, vector<1x4x384xf32>
    %12 = vector.shape_cast %11 : vector<1x4x384xf32> to vector<4x384xf32>
    %13 = vector.shape_cast %10 : vector<4x384xf32> to vector<1x4x384xf32>
    tpu.vector_store %arg5[%c0_10, %c0_11, %c0_12], %13 {strides = array<i32>} : memref<1x4x384xf32, #tpu.memory_space<vmem>>, vector<1x4x384xf32>,
    return
  }
  func.func @transform_0(%arg0: i32) -> (i32, i32, i32) {
    %c0_i32 = arith.constant 0 : i32
    %c0_i32_0 = arith.constant 0 : i32
    %c0_i32_1 = arith.constant 0 : i32
    return %arg0, %c0_i32, %c0_i32_0 : i32, i32, i32
  }
  func.func @transform_1(%arg0: i32) -> (i32, i32) {
    %c0_i32 = arith.constant 0 : i32
    %c0_i32_0 = arith.constant 0 : i32
    %c0_i32_1 = arith.constant 0 : i32
    return %c0_i32, %c0_i32_0 : i32, i32
  }
  func.func @transform_2(%arg0: i32) -> (i32, i32) {
    %c0_i32 = arith.constant 0 : i32
    %c0_i32_0 = arith.constant 0 : i32
    %c0_i32_1 = arith.constant 0 : i32
    return %c0_i32, %c0_i32_0 : i32, i32
  }
  func.func @transform_3(%arg0: i32) -> (i32, i32) {
    %c0_i32 = arith.constant 0 : i32
    %c0_i32_0 = arith.constant 0 : i32
    %c0_i32_1 = arith.constant 0 : i32
    return %c0_i32, %c0_i32_0 : i32, i32
  }
  func.func @transform_4(%arg0: i32) -> (i32, i32, i32) {
    %c0_i32 = arith.constant 0 : i32
    %c0_i32_0 = arith.constant 0 : i32
    %c0_i32_1 = arith.constant 0 : i32
    return %arg0, %c0_i32, %c0_i32_0 : i32, i32, i32
  }
}

</mosaic_0001>

<llo_original>
// kernel: tpu_custom_call.1
$region0: #{tpu_custom_call.1}
  #allocation0 [shape = 'u32[]', space=smem, size = 0x4, offset = 0x4, fixed_abs, tag = 'smem constant byte address 0x4 - core index']
  #allocation1 [shape = 'u32[72,128]{1,0:T(1,128)}', space=vmem, size = 0x9000, scoped, tag = 'internal scratch']
  %s0 = inlined_call_operand.vmem [shape: f32[2,36,384], index: 0, kind: input, shape index: {}]
  %s1 = inlined_call_operand.vmem [shape: f32[8,36], index: 1, kind: input, shape index: {}]
  %s2 = inlined_call_operand.vmem [shape: f32[8,1], index: 2, kind: input, shape index: {}]
  %s3 = inlined_call_operand.vmem [shape: f32[4,8], index: 3, kind: input, shape index: {}]
  %s4 = inlined_call_operand.hbm [shape: f32[2,4,384], index: 4, kind: output, shape index: {}]
  %s5 = sld [smem:[#allocation0]]
  $region49: #{tpu_custom_call.1} parent=0
    _
  %s7 = ssub.s32 1, %s5
  %s8 = scalar_select 0, %s7, %s5
  $region1: #{tpu_custom_call.1} parent=0
    #allocation2 [shape = 'u8[12288]{0}', space=vmem, size = 0x3000, scoped, tag = 'output window, operand 0']
    #allocation3 [shape = 's32[2]{0}', space=sflag, size = 0x8, scoped, tag = 'scoped memory for tpu_custom_call.1']
    %9 = vsyncpa [#allocation3], 0
    %s10 = scalar_lea.sflag [#allocation3], 1
    %11 = vsyncpa %s10, 0
    loop: start=0, step=1, limit=4
    $region2: #{tpu_custom_call.1} parent=1 // loop_pre_header
      _
    $region3: #{tpu_custom_call.1} parent=1 // loop_header
      %s13 = sphi 0, %s17
      %p14 = scmp.ge.s32.totalorder %s13, 4
      %s23 = sphi 0, %s25
      %s26 = sphi 0, %s23
      %s27 = sphi 0, %s26
      %s43 = sphi 0, %s27
      %s47 = sphi 0, %s47
      %s49 = sphi 0, %s47
      %s50 = sphi 0, %s49
      %s64 = sphi 0, %s50
      %s68 = sphi 0, %s68
      %s70 = sphi 0, %s68
      %s71 = sphi 0, %s70
      %s85 = sphi 0, %s71
      %s89 = sphi 0, %s89
      %s91 = sphi 0, %s89
      %s92 = sphi 0, %s91
      %s106 = sphi 0, %s92
      %s112 = sphi 0, %s114
      %s115 = sphi 0, %s112
      %s116 = sphi 0, %s115
      %s132 = sphi 0, %s116
    $region4: #{tpu_custom_call.1} parent=1 // loop_header_branch
      %16 = sbr.rel (%p14) target = $region8
    $region5: #{tpu_custom_call.1} parent=1 // loop_body
      %s18 = ssub.s32 %s13, 1
      %s19 = ssub.s32 %s13, 2
      %s20 = sadd.s32 %s13, 1
      %s21 = ssub.s32 %s13, %s20
      %p22 = scmp.eq.s32.totalorder %s21, 0
      %s24 = sadd.s32 %s23, 1
      %s25 = scalar_select %p22, %s23, %s24
      %p28 = pneg %p22
      %p29 = scmp.eq.s32.totalorder %s13, 1
      %p30 = por %p28, %p29
      %p31 = scmp.ne.s32.totalorder %s23, %s26
      %p32 = scmp.eq.s32.totalorder %s13, 0
      %p33 = por %p31, %p32
      %p34 = scmp.ne.s32.totalorder %s23, %s26
      %p35 = scmp.eq.s32.totalorder %s18, 1
      %p36 = por %p34, %p35
      %p37 = scmp.ne.s32.totalorder %s26, %s27
      %p38 = scmp.eq.s32.totalorder %s18, 0
      %p39 = por %p37, %p38
      %p40 = scmp.ne.s32.totalorder %s26, %s27
      %p41 = scmp.eq.s32.totalorder %s19, 1
      %p42 = por %p40, %p41
      %p44 = scmp.ne.s32.totalorder %s27, %s43
      %p45 = scmp.eq.s32.totalorder %s19, 0
      %p46 = por %p44, %p45
      %s48 = sadd.s32 %s47, 1
      %p51 = scmp.eq.s32.totalorder %s13, 1
      %p52 = scmp.ne.s32.totalorder %s47, %s49
      %p53 = scmp.eq.s32.totalorder %s13, 0
      %p54 = por %p52, %p53
      %p55 = scmp.ne.s32.totalorder %s47, %s49
      %p56 = scmp.eq.s32.totalorder %s18, 1
      %p57 = por %p55, %p56
      %p58 = scmp.ne.s32.totalorder %s49, %s50
      %p59 = scmp.eq.s32.totalorder %s18, 0
      %p60 = por %p58, %p59
      %p61 = scmp.ne.s32.totalorder %s49, %s50
      %p62 = scmp.eq.s32.totalorder %s19, 1
      %p63 = por %p61, %p62
      %p65 = scmp.ne.s32.totalorder %s50, %s64
      %p66 = scmp.eq.s32.totalorder %s19, 0
      %p67 = por %p65, %p66
      %s69 = sadd.s32 %s68, 1
      %p72 = scmp.eq.s32.totalorder %s13, 1
      %p73 = scmp.ne.s32.totalorder %s68, %s70
      %p74 = scmp.eq.s32.totalorder %s13, 0
      %p75 = por %p73, %p74
      %p76 = scmp.ne.s32.totalorder %s68, %s70
      %p77 = scmp.eq.s32.totalorder %s18, 1
      %p78 = por %p76, %p77
      %p79 = scmp.ne.s32.totalorder %s70, %s71
      %p80 = scmp.eq.s32.totalorder %s18, 0
      %p81 = por %p79, %p80
      %p82 = scmp.ne.s32.totalorder %s70, %s71
      %p83 = scmp.eq.s32.totalorder %s19, 1
      %p84 = por %p82, %p83
      %p86 = scmp.ne.s32.totalorder %s71, %s85
      %p87 = scmp.eq.s32.totalorder %s19, 0
      %p88 = por %p86, %p87
      %s90 = sadd.s32 %s89, 1
      %p93 = scmp.eq.s32.totalorder %s13, 1
      %p94 = scmp.ne.s32.totalorder %s89, %s91
      %p95 = scmp.eq.s32.totalorder %s13, 0
      %p96 = por %p94, %p95
      %p97 = scmp.ne.s32.totalorder %s89, %s91
      %p98 = scmp.eq.s32.totalorder %s18, 1
      %p99 = por %p97, %p98
      %p100 = scmp.ne.s32.totalorder %s91, %s92
      %p101 = scmp.eq.s32.totalorder %s18, 0
      %p102 = por %p100, %p101
      %p103 = scmp.ne.s32.totalorder %s91, %s92
      %p104 = scmp.eq.s32.totalorder %s19, 1
      %p105 = por %p103, %p104
      %p107 = scmp.ne.s32.totalorder %s92, %s106
      %p108 = scmp.eq.s32.totalorder %s19, 0
      %p109 = por %p107, %p108
      %s110 = ssub.s32 %s13, %s20
      %p111 = scmp.eq.s32.totalorder %s110, 0
      %s113 = sadd.s32 %s112, 1
      %s114 = scalar_select %p111, %s112, %s113
      %p117 = pneg %p111
      %p118 = scmp.eq.s32.totalorder %s13, 1
      %p119 = por %p117, %p118
      %p120 = scmp.ne.s32.totalorder %s112, %s115
      %p121 = scmp.eq.s32.totalorder %s13, 0
      %p122 = por %p120, %p121
      %p123 = scmp.ne.s32.totalorder %s112, %s115
      %p124 = scmp.eq.s32.totalorder %s18, 1
      %p125 = por %p123, %p124
      %p126 = scmp.ne.s32.totalorder %s115, %s116
      %p127 = scmp.eq.s32.totalorder %s18, 0
      %p128 = por %p126, %p127
      %p129 = scmp.ne.s32.totalorder %s115, %s116
      %p130 = scmp.eq.s32.totalorder %s19, 1
      %p131 = por %p129, %p130
      %p133 = scmp.ne.s32.totalorder %s116, %s132
      %p134 = scmp.eq.s32.totalorder %s19, 0
      %p135 = por %p133, %p134
      %p136 = scmp.le.s32.totalorder 1, %s13
      %p137 = scmp.lt.s32.totalorder %s13, 3
      %p138 = pnand %p136, %p137
      %p139 = pneg %p138
      // Predicated region
      $region9: #{tpu_custom_call.1} parent=5 // pred_check
        _
      $region10: #{tpu_custom_call.1} parent=5 // pred_check_branch
        %141 = sbr.rel (%p138) target = $region12
      $region11: #{tpu_custom_call.1} parent=5 // pred_region
        %s142 = ssub.s32 %s13, 1
        // Predicated region
        $region13: #{tpu_custom_call.1} parent=11 // pred_check
          %p143 = pneg %p60
        $region14: #{tpu_custom_call.1} parent=11 // pred_check_branch
          %145 = sbr.rel (%p143) target = $region16
        $region15: #{tpu_custom_call.1} parent=11 // pred_region
          _
        $region16: #{tpu_custom_call.1} parent=11 // pred_fallthru
          _
        // Predicated region
        $region17: #{tpu_custom_call.1} parent=11 // pred_check
          %p146 = pneg %p81
        $region18: #{tpu_custom_call.1} parent=11 // pred_check_branch
          %148 = sbr.rel (%p146) target = $region20
        $region19: #{tpu_custom_call.1} parent=11 // pred_region
          _
        $region20: #{tpu_custom_call.1} parent=11 // pred_fallthru
          _
        // Predicated region
        $region21: #{tpu_custom_call.1} parent=11 // pred_check
          %p149 = pneg %p102
        $region22: #{tpu_custom_call.1} parent=11 // pred_check_branch
          %151 = sbr.rel (%p149) target = $region24
        $region23: #{tpu_custom_call.1} parent=11 // pred_region
          _
        $region24: #{tpu_custom_call.1} parent=11 // pred_fallthru
          _
      $region12: #{tpu_custom_call.1} parent=5 // pred_fallthru
        _
      %p152 = scmp.lt.s32.totalorder %s13, 2
      // Predicated region
      $region25: #{tpu_custom_call.1} parent=5 // pred_check
        %p153 = pneg %p152
      $region26: #{tpu_custom_call.1} parent=5 // pred_check_branch
        %155 = sbr.rel (%p153) target = $region28
      $region27: #{tpu_custom_call.1} parent=5 // pred_region
        // Predicated region
        $region29: #{tpu_custom_call.1} parent=27 // pred_check
          %p156 = pneg %p33
        $region30: #{tpu_custom_call.1} parent=27 // pred_check_branch
          %158 = sbr.rel (%p156) target = $region32
        $region31: #{tpu_custom_call.1} parent=27 // pred_region
          %p159 = scmp.lt.s32.totalorder %s13, 1
          %s160 = scalar_select %p159, %s13, 1
          %s161 = smul.addr %s160, 15
          %s162 = smul.addr %s161, 8
          %s163 = scalar_lea.vmem %s0, %s162
        $region32: #{tpu_custom_call.1} parent=27 // pred_fallthru
          _
      $region28: #{tpu_custom_call.1} parent=5 // pred_fallthru
        _
      %p164 = scmp.le.s32.totalorder 1, %s13
      %p165 = scmp.lt.s32.totalorder %s13, 3
      %p166 = pnand %p164, %p165
      %p167 = pneg %p166
      // Predicated region
      $region33: #{tpu_custom_call.1} parent=5 // pred_check
        _
      $region34: #{tpu_custom_call.1} parent=5 // pred_check_branch
        %169 = sbr.rel (%p166) target = $region36
      $region35: #{tpu_custom_call.1} parent=5 // pred_region
        %s170 = ssub.s32 %s13, 1
        %p171 = scmp.lt.s32.totalorder %s18, 1
        %s172 = scalar_select %p171, %s18, 1
        %s173 = smul.addr %s172, 15
        %s174 = smul.addr %s173, 8
        %s175 = scalar_lea.vmem %s0, %s174
        %p176 = pneg %p39
        %p177 = pneg %p36
        %p178 = pneg %p60
        %p179 = pneg %p57
        %p180 = pneg %p81
        %p181 = pneg %p78
        %p182 = pneg %p102
        %p183 = pneg %p99
        %p184 = pneg %p128
        %p185 = pneg %p125
        %s186 = sand.u32 %s115, 1
        %s187 = scalar_lea.sflag [#allocation3], %s186
        %s188 = sand.u32 %s115, 1
        %s189 = smul.addr %s188, 12
        %s190 = scalar_lea.vmem [#allocation2], %s189
        %p191 = scmp.lt.s32.totalorder %s18, 1
        %s192 = scalar_select %p191, %s18, 1
        %s193 = smul.addr %s192, 15
        %s194 = smul.addr %s193, 8
        %s195 = scalar_lea.vmem %s0, %s194
        %v196 = vld [vmem:[%s195] sm:$0xff]
        %v197 = vld [vmem:[%s195 + $0x8] sm:$0xff]
        %v198 = vld [vmem:[%s195 + $0x10] sm:$0xff]
        %v199 = vld [vmem:[%s195 + $0x18] sm:$0xff]
        %v200 = vld [vmem:[%s195 + $0x20] sm:$0xff]
        %v201 = vld [vmem:[%s195 + $0x28] sm:$0xff]
        %v202 = vld [vmem:[%s195 + $0x30] sm:$0xff]
        %v203 = vld [vmem:[%s195 + $0x38] sm:$0xff]
        %v204 = vld [vmem:[%s195 + $0x40] sm:$0xff]
        %v205 = vld [vmem:[%s195 + $0x48] sm:$0xff]
        %v206 = vld [vmem:[%s195 + $0x50] sm:$0xff]
        %v207 = vld [vmem:[%s195 + $0x58] sm:$0xff]
        %v208 = vld [vmem:[%s195 + $0x60] sm:$0xf]
        %v209 = vld [vmem:[%s195 + $0x68] sm:$0xf]
        %v210 = vld [vmem:[%s195 + $0x70] sm:$0xf]
        %v211 = vld [vmem:[%s1] sm:$0xff]
        %v212 = vld [vmem:[%s2] sm:$0xff]
        %214 = vset.pattern.permute.xlu0 0
        %215 = vperm.xlu0 %214, %v212
        %v216 = vpop.permute.xlu0 %215
        %vm218 = vcmask 293888
        %v220 = vsel %vm218, %v211, 0
        %vm222 = vcmask 1043456
        %v224 = vsel %vm222, %v208, 0
        %v227 = vsel %vm222, %v209, 0
        %v230 = vsel %vm222, %v210, 0
        %232 = vmatpush.msra.mxu0 0.0
        %233 = vmatpush.msra.mxu0 0.0
        %234 = vmatpush.msra.mxu0 0.0
        %235 = vmatpush.msra.mxu0 0.0
        %236 = vmatpush.msra.mxu0 0.0
        %237 = vmatpush.msra.mxu0 0.0
        %238 = vmatpush.msra.mxu0 0.0
        %239 = vmatpush.msra.mxu0 0.0
        %240 = vmatpush.msra.mxu0 0.0
        %241 = vmatpush.msra.mxu0 0.0
        %242 = vmatpush.msra.mxu0 0.0
        %243 = vmatpush.msra.mxu0 %v224
        %244 = vmatpush.msra.mxu0 %v205
        %245 = vmatpush.msra.mxu0 %v202
        %246 = vmatpush.msra.mxu0 %v199
        %247 = vmatpush.msra.mxu0 %v196
        %248 = vmatmul.f32.gmra.mxu0 %v220
        %v249 = vpop.f32.mrf.mxu0
        %v250 = vadd.f32 %v216, %v249
        %251 = vdwg.mxu0
        %252 = vmatpush.msra.mxu0 0.0
        %253 = vmatpush.msra.mxu0 0.0
        %254 = vmatpush.msra.mxu0 0.0
        %255 = vmatpush.msra.mxu0 0.0
        %256 = vmatpush.msra.mxu0 0.0
        %257 = vmatpush.msra.mxu0 0.0
        %258 = vmatpush.msra.mxu0 0.0
        %259 = vmatpush.msra.mxu0 0.0
        %260 = vmatpush.msra.mxu0 0.0
        %261 = vmatpush.msra.mxu0 0.0
        %262 = vmatpush.msra.mxu0 0.0
        %263 = vmatpush.msra.mxu0 %v227
        %264 = vmatpush.msra.mxu0 %v206
        %265 = vmatpush.msra.mxu0 %v203
        %266 = vmatpush.msra.mxu0 %v200
        %267 = vmatpush.msra.mxu0 %v197
        %268 = vmatmul.f32.gmra.mxu0 %v220
        %v269 = vpop.f32.mrf.mxu0
        %v270 = vadd.f32 %v216, %v269
        %271 = vdwg.mxu0
        %272 = vmatpush.msra.mxu0 0.0
        %273 = vmatpush.msra.mxu0 0.0
        %274 = vmatpush.msra.mxu0 0.0
        %275 = vmatpush.msra.mxu0 0.0
        %276 = vmatpush.msra.mxu0 0.0
        %277 = vmatpush.msra.mxu0 0.0
        %278 = vmatpush.msra.mxu0 0.0
        %279 = vmatpush.msra.mxu0 0.0
        %280 = vmatpush.msra.mxu0 0.0
        %281 = vmatpush.msra.mxu0 0.0
        %282 = vmatpush.msra.mxu0 0.0
        %283 = vmatpush.msra.mxu0 %v230
        %284 = vmatpush.msra.mxu0 %v207
        %285 = vmatpush.msra.mxu0 %v204
        %286 = vmatpush.msra.mxu0 %v201
        %287 = vmatpush.msra.mxu0 %v198
        %288 = vmatmul.f32.gmra.mxu0 %v220
        %v289 = vpop.f32.mrf.mxu0
        %v290 = vadd.f32 %v216, %v289
        %291 = vdwg.mxu0
        %v292 = vmax.f32 %v250, 0.0
        %v293 = vmax.f32 %v270, 0.0
        %v294 = vmax.f32 %v290, 0.0
        %v295 = vld [vmem:[%s3] sm:$0xf]
        %vm296 = vcmask 64512
        %v298 = vsel %vm296, %v295, 0
        %300 = vmatpush.msra.mxu0 0.0
        %301 = vmatpush.msra.mxu0 0.0
        %302 = vmatpush.msra.mxu0 0.0
        %303 = vmatpush.msra.mxu0 0.0
        %304 = vmatpush.msra.mxu0 0.0
        %305 = vmatpush.msra.mxu0 0.0
        %306 = vmatpush.msra.mxu0 0.0
        %307 = vmatpush.msra.mxu0 0.0
        %308 = vmatpush.msra.mxu0 0.0
        %309 = vmatpush.msra.mxu0 0.0
        %310 = vmatpush.msra.mxu0 0.0
        %311 = vmatpush.msra.mxu0 0.0
        %312 = vmatpush.msra.mxu0 0.0
        %313 = vmatpush.msra.mxu0 0.0
        %314 = vmatpush.msra.mxu0 0.0
        %315 = vmatpush.msra.mxu0 %v292
        %316 = vmatmul.f32.gmra.mxu0 %v298
        %v317 = vpop.f32.mrf.mxu0
        %v318 = vadd.f32 0.0, %v317
        %319 = vdwg.mxu0
        %320 = vmatpush.msra.mxu0 0.0
        %321 = vmatpush.msra.mxu0 0.0
        %322 = vmatpush.msra.mxu0 0.0
        %323 = vmatpush.msra.mxu0 0.0
        %324 = vmatpush.msra.mxu0 0.0
        %325 = vmatpush.msra.mxu0 0.0
        %326 = vmatpush.msra.mxu0 0.0
        %327 = vmatpush.msra.mxu0 0.0
        %328 = vmatpush.msra.mxu0 0.0
        %329 = vmatpush.msra.mxu0 0.0
        %330 = vmatpush.msra.mxu0 0.0
        %331 = vmatpush.msra.mxu0 0.0
        %332 = vmatpush.msra.mxu0 0.0
        %333 = vmatpush.msra.mxu0 0.0
        %334 = vmatpush.msra.mxu0 0.0
        %335 = vmatpush.msra.mxu0 %v293
        %336 = vmatmul.f32.gmra.mxu0 %v298
        %v337 = vpop.f32.mrf.mxu0
        %v338 = vadd.f32 0.0, %v337
        %339 = vdwg.mxu0
        %340 = vmatpush.msra.mxu0 0.0
        %341 = vmatpush.msra.mxu0 0.0
        %342 = vmatpush.msra.mxu0 0.0
        %343 = vmatpush.msra.mxu0 0.0
        %344 = vmatpush.msra.mxu0 0.0
        %345 = vmatpush.msra.mxu0 0.0
        %346 = vmatpush.msra.mxu0 0.0
        %347 = vmatpush.msra.mxu0 0.0
        %348 = vmatpush.msra.mxu0 0.0
        %349 = vmatpush.msra.mxu0 0.0
        %350 = vmatpush.msra.mxu0 0.0
        %351 = vmatpush.msra.mxu0 0.0
        %352 = vmatpush.msra.mxu0 0.0
        %353 = vmatpush.msra.mxu0 0.0
        %354 = vmatpush.msra.mxu0 0.0
        %355 = vmatpush.msra.mxu0 %v294
        %356 = vmatmul.f32.gmra.mxu0 %v298
        %v357 = vpop.f32.mrf.mxu0
        %v358 = vadd.f32 0.0, %v357
        %359 = vdwg.mxu0
        %v362 = vrot.slane %v338, 4
        %v363 = vsel %vm222, %v318, %v362
        %365 = vst [vmem:[%s190] sm:$0xff] %v363
        %366 = vst [vmem:[%s190 + $0x8] sm:$0xf] %v358
        %s367 = sand.u32 %s115, 1
        %s368 = scalar_lea.sflag [#allocation3], %s367
        %s369 = sand.u32 %s115, 1
        %s370 = smul.addr %s369, 12
        %s371 = scalar_lea.vmem [#allocation2], %s370
        // Predicated region
        $region37: #{tpu_custom_call.1} parent=35 // pred_check
          %p372 = pneg %p125
        $region38: #{tpu_custom_call.1} parent=35 // pred_check_branch
          %374 = sbr.rel (%p372) target = $region40
        $region39: #{tpu_custom_call.1} parent=35 // pred_region
          %376 = vsyncadd %s368, 0
          %s377 = smul.addr %s18, 3
          %s378 = smul.addr %s377, 4
          %s379 = scalar_lea.hbm %s4, %s378
          %s381 = sshll.u32 %s371, 4
          %s382 = int_to_ptr.vmem [resolvable:$true] %s381
          %s383 = sshll.u32 %s379, 4
          %s384 = int_to_ptr.hbm [resolvable:$true] %s383
          %386 = dma.vmem_to_hbm [thread:$0]  %s382, 192, %s384, %s368
        $region40: #{tpu_custom_call.1} parent=35 // pred_fallthru
          _
      $region36: #{tpu_custom_call.1} parent=5 // pred_fallthru
        _
      %p387 = scmp.le.s32.totalorder 2, %s13
      // Predicated region
      $region41: #{tpu_custom_call.1} parent=5 // pred_check
        %p388 = pneg %p387
      $region42: #{tpu_custom_call.1} parent=5 // pred_check_branch
        %390 = sbr.rel (%p388) target = $region44
      $region43: #{tpu_custom_call.1} parent=5 // pred_region
        %s391 = ssub.s32 %s13, 2
        // Predicated region
        $region45: #{tpu_custom_call.1} parent=43 // pred_check
          %p392 = pneg %p131
        $region46: #{tpu_custom_call.1} parent=43 // pred_check_branch
          %394 = sbr.rel (%p392) target = $region48
        $region47: #{tpu_custom_call.1} parent=43 // pred_region
          %s395 = sand.u32 %s116, 1
          %s396 = scalar_lea.sflag [#allocation3], %s395
          %s397 = sand.u32 %s116, 1
          %s398 = smul.addr %s397, 12
          %s399 = scalar_lea.vmem [#allocation2], %s398
          %401 = dma.done %s396, 192
        $region48: #{tpu_custom_call.1} parent=43 // pred_fallthru
          _
      $region44: #{tpu_custom_call.1} parent=5 // pred_fallthru
        _
    $region6: #{tpu_custom_call.1} parent=1 // loop_footer
      %s17 = sadd.s32 1, %s13
    $region7: #{tpu_custom_call.1} parent=1 // loop_footer_branch
      %12 = sbr.rel target = $region3
    $region8: #{tpu_custom_call.1} parent=1 // loop_exit
      _
    %402 = vsyncpa [#allocation3], 1
    %s403 = scalar_lea.sflag [#allocation3], 1
    %404 = vsyncpa %s403, 1

</llo_original>
